<compile_context>
chip_gen: v6e
topology: v6e:2x2x1
jax: 0.10.0
libtpu: 0.0.40
codegen_flags: <defaults>
</compile_context>

<pallas_src>
import functools

import jax
import jax.numpy as jnp
from jax.experimental import pallas as pl
from jax.experimental.pallas import tpu as pltpu

LANE = 128
SUBLANE = 8


def _round_up(x, m):
    return (x + m - 1) // m * m


def dqn_kernel(x_ref, w1_ref, b1_ref, w2_ref, b2_ref, w3_ref, b3_ref, o_ref):
    cdt = w1_ref.dtype  # compute dtype of the matmul operands (f32 or bf16)
    x = x_ref[...].astype(cdt)
    # fc1 + relu (accumulate in f32, bias-add / ReLU in f32)
    h1 = jnp.dot(x, w1_ref[...], preferred_element_type=jnp.float32) + b1_ref[...]
    h1 = jnp.maximum(h1, 0.0)
    # fc2 + relu
    h2 = (
        jnp.dot(h1.astype(cdt), w2_ref[...], preferred_element_type=jnp.float32)
        + b2_ref[...]
    )
    h2 = jnp.maximum(h2, 0.0)
    # fc3 (no activation); output is lane-dense (padded to a multiple of 128)
    y = (
        jnp.dot(h2.astype(cdt), w3_ref[...], preferred_element_type=jnp.float32)
        + b3_ref[...]
    )
    o_ref[...] = y.astype(o_ref.dtype)


def prepare_params(params, *, compute_dtype=jnp.float32):
    """One-time (outside jit) param prep: pad last layer to a lane multiple and
    cast weights to the matmul compute dtype. Biases stay f32."""
    w1, b1 = params["w1"], params["b1"]
    w2, b2 = params["w2"], params["b2"]
    w3, b3 = params["w3"], params["b3"]

    action_dim = w3.shape[1]
    out_pad = _round_up(action_dim, LANE)
    if out_pad != action_dim:
        w3 = jnp.pad(w3, ((0, 0), (0, out_pad - action_dim)))
        b3 = jnp.pad(b3, ((0, 0), (0, out_pad - action_dim)))

    return {
        "w1": w1.astype(compute_dtype),
        "b1": b1.astype(jnp.float32),
        "w2": w2.astype(compute_dtype),
        "b2": b2.astype(jnp.float32),
        "w3": w3.astype(compute_dtype),
        "b3": b3.astype(jnp.float32),
    }


@functools.partial(jax.jit, static_argnames=("action_dim", "block_m"))
def dqn_forward(x, prepared, *, action_dim, block_m=1024):
    """x: (B, state_dim) f32. prepared: output of prepare_params()."""
    w1, b1 = prepared["w1"], prepared["b1"]
    w2, b2 = prepared["w2"], prepared["b2"]
    w3, b3 = prepared["w3"], prepared["b3"]

    B, state_dim = x.shape
    out_pad = w3.shape[1]

    # --- Batch tiling -------------------------------------------------------
    # Keep >= 2 grid steps when B > 8 so v7x's two TensorCores both get work,
    # while capping the tile at block_m (default 1024 rows).
    if B <= SUBLANE:
        tm = SUBLANE
    else:
        tm = min(block_m, _round_up(pl.cdiv(B, 2), SUBLANE))
    B_pad = _round_up(B, tm)
    if B_pad != B:
        x = jnp.pad(x, ((0, B_pad - B), (0, 0)))

    grid = (B_pad // tm,)

    # Weights/biases: same block for every grid step -> stay VMEM-resident.
    resident = lambda shape: pl.BlockSpec(shape, lambda i: (0, 0))

    out = pl.pallas_call(
        dqn_kernel,
        out_shape=jax.ShapeDtypeStruct((B_pad, out_pad), jnp.float32),
        grid=grid,
        in_specs=[
            pl.BlockSpec((tm, state_dim), lambda i: (i, 0)),  # batch-tiled input
            resident(w1.shape),
            resident(b1.shape),
            resident(w2.shape),
            resident(b2.shape),
            resident(w3.shape),
            resident(b3.shape),
        ],
        out_specs=pl.BlockSpec((tm, out_pad), lambda i: (i, 0)),
        compiler_params=pltpu.CompilerParams(
            dimension_semantics=("parallel",),  # batch tiles are independent
        ),
    )(x, w1, b1, w2, b2, w3, b3)

    # Strip batch / action-dim padding outside the kernel (no-ops when unneeded).
    if B_pad != B:
        out = out[:B]
    if out_pad != action_dim:
        out = out[:, :action_dim]
    return out


def init_params(key, state_dim, action_dim, hidden=128):
    """nn.Linear default init: U(-1/sqrt(fan_in), 1/sqrt(fan_in)).
    Weights stored as (in, out) (transposed vs. PyTorch's (out, in))."""
    ks = jax.random.split(key, 6)

    def linear(kw, kb, fan_in, fan_out):
        bound = 1.0 / jnp.sqrt(jnp.float32(fan_in))
        w = jax.random.uniform(kw, (fan_in, fan_out), jnp.float32, -bound, bound)
        b = jax.random.uniform(kb, (1, fan_out), jnp.float32, -bound, bound)
        return w, b

    w1, b1 = linear(ks[0], ks[1], state_dim, hidden)
    w2, b2 = linear(ks[2], ks[3], hidden, hidden)
    w3, b3 = linear(ks[4], ks[5], hidden, action_dim)
    return {"w1": w1, "b1": b1, "w2": w2, "b2": b2, "w3": w3, "b3": b3}


def dqn_ref(x, p):
    h1 = jnp.maximum(x @ p["w1"] + p["b1"], 0.0)
    h2 = jnp.maximum(h1 @ p["w2"] + p["b2"], 0.0)
    return h2 @ p["w3"] + p["b3"]


if __name__ == "__main__":
    key = jax.random.PRNGKey(0)
    k_param, k_x1, k_x2 = jax.random.split(key, 3)

    state_dim = 16
    action_dim = 8
    params = init_params(k_param, state_dim, action_dim, hidden=128)
    prepared = prepare_params(params, compute_dtype=jnp.float32)

    # Small (online-inference) shape: B=2 -> one 8-row tile, single grid step.
    x_small = jax.random.normal(k_x1, (2, state_dim), jnp.float32)
    out_small = jax.block_until_ready(
        dqn_forward(x_small, prepared, action_dim=action_dim)
    )
    ref_small = dqn_ref(x_small, params)
    assert out_small.shape == (2, action_dim), out_small.shape
    assert jnp.allclose(out_small, ref_small, atol=1e-4, rtol=1e-4), (
        float(jnp.max(jnp.abs(out_small - ref_small)))
    )

    # Batched shape: B=512 -> tm=256, grid=(2,) so both v7x TCs get a tile;
    # no x padding and weights stay VMEM-resident across tiles.
    x_big = jax.random.normal(k_x2, (512, state_dim), jnp.float32)
    out_big = jax.block_until_ready(
        dqn_forward(x_big, prepared, action_dim=action_dim)
    )
    ref_big = dqn_ref(x_big, params)
    assert out_big.shape == (512, action_dim), out_big.shape
    assert jnp.allclose(out_big, ref_big, atol=1e-4, rtol=1e-4), (
        float(jnp.max(jnp.abs(out_big - ref_big)))
    )

    print("KERNEL_OK")
</pallas_src>

<mosaic_0001>
module attributes {stable_mosaic.version = 11 : i64} {
  func.func @dqn_kernel(%arg0: i32, %arg1: memref<8x16xf32, #tpu.memory_space<vmem>>, %arg2: memref<16x128xf32, #tpu.memory_space<vmem>>, %arg3: memref<1x128xf32, #tpu.memory_space<vmem>>, %arg4: memref<128x128xf32, #tpu.memory_space<vmem>>, %arg5: memref<1x128xf32, #tpu.memory_space<vmem>>, %arg6: memref<128x128xf32, #tpu.memory_space<vmem>>, %arg7: memref<1x128xf32, #tpu.memory_space<vmem>>, %arg8: memref<8x128xf32, #tpu.memory_space<vmem>>) attributes {dimension_semantics = [#tpu.dimension_semantics<parallel>], iteration_bounds = array<i64: 1>, scalar_prefetch = 0 : i64, scratch_operands = 0 : i64, tpu.core_type = #tpu.core_type<tc>, window_params = [{transform_indices = @transform_0, window_bounds = array<i64: 8, 16>}, {pipeline_mode = #tpu.pipeline_mode<synchronous>, transform_indices = @transform_1, window_bounds = array<i64: 16, 128>}, {pipeline_mode = #tpu.pipeline_mode<synchronous>, transform_indices = @transform_2, window_bounds = array<i64: 1, 128>}, {pipeline_mode = #tpu.pipeline_mode<synchronous>, transform_indices = @transform_3, window_bounds = array<i64: 128, 128>}, {pipeline_mode = #tpu.pipeline_mode<synchronous>, transform_indices = @transform_4, window_bounds = array<i64: 1, 128>}, {pipeline_mode = #tpu.pipeline_mode<synchronous>, transform_indices = @transform_5, window_bounds = array<i64: 128, 128>}, {pipeline_mode = #tpu.pipeline_mode<synchronous>, transform_indices = @transform_6, window_bounds = array<i64: 1, 128>}, {transform_indices = @transform_7, window_bounds = array<i64: 8, 128>}]} {
    %c0 = arith.constant 0 : index
    %c0_0 = arith.constant 0 : index
    %0 = vector.load %arg1[%c0, %c0_0] : memref<8x16xf32, #tpu.memory_space<vmem>>, vector<8x16xf32>
    %c0_1 = arith.constant 0 : index
    %c0_2 = arith.constant 0 : index
    %1 = vector.load %arg2[%c0_1, %c0_2] : memref<16x128xf32, #tpu.memory_space<vmem>>, vector<16x128xf32>
    %cst = arith.constant dense<0.000000e+00> : vector<8x128xf32>
    %2 = tpu.matmul %0, %1, %cst {dimension_numbers = #tpu.dot_dimension_numbers<[1], [0], [0], [1], [0, 0, 1, 1], [], []>} : vector<8x16xf32>, vector<16x128xf32>, vector<8x128xf32> -> vector<8x128xf32>
    %c0_3 = arith.constant 0 : index
    %c0_4 = arith.constant 0 : index
    %3 = vector.load %arg3[%c0_3, %c0_4] : memref<1x128xf32, #tpu.memory_space<vmem>>, vector<1x128xf32>
    %4 = vector.broadcast %3 : vector<1x128xf32> to vector<8x128xf32>
    %5 = arith.addf %2, %4 : vector<8x128xf32>
    %cst_5 = arith.constant 0.000000e+00 : f32
    %6 = vector.broadcast %cst_5 : f32 to vector<8x128xf32>
    %7 = arith.maximumf %5, %6 : vector<8x128xf32>
    %c0_6 = arith.constant 0 : index
    %c0_7 = arith.constant 0 : index
    %8 = vector.load %arg4[%c0_6, %c0_7] : memref<128x128xf32, #tpu.memory_space<vmem>>, vector<128x128xf32>
    %cst_8 = arith.constant dense<0.000000e+00> : vector<8x128xf32>
    %9 = tpu.matmul %7, %8, %cst_8 {dimension_numbers = #tpu.dot_dimension_numbers<[1], [0], [0], [1], [0, 0, 1, 1], [], []>} : vector<8x128xf32>, vector<128x128xf32>, vector<8x128xf32> -> vector<8x128xf32>
    %c0_9 = arith.constant 0 : index
    %c0_10 = arith.constant 0 : index
    %10 = vector.load %arg5[%c0_9, %c0_10] : memref<1x128xf32, #tpu.memory_space<vmem>>, vector<1x128xf32>
    %11 = vector.broadcast %10 : vector<1x128xf32> to vector<8x128xf32>
    %12 = arith.addf %9, %11 : vector<8x128xf32>
    %cst_11 = arith.constant 0.000000e+00 : f32
    %13 = vector.broadcast %cst_11 : f32 to vector<8x128xf32>
    %14 = arith.maximumf %12, %13 : vector<8x128xf32>
    %c0_12 = arith.constant 0 : index
    %c0_13 = arith.constant 0 : index
    %15 = vector.load %arg6[%c0_12, %c0_13] : memref<128x128xf32, #tpu.memory_space<vmem>>, vector<128x128xf32>
    %cst_14 = arith.constant dense<0.000000e+00> : vector<8x128xf32>
    %16 = tpu.matmul %14, %15, %cst_14 {dimension_numbers = #tpu.dot_dimension_numbers<[1], [0], [0], [1], [0, 0, 1, 1], [], []>} : vector<8x128xf32>, vector<128x128xf32>, vector<8x128xf32> -> vector<8x128xf32>
    %c0_15 = arith.constant 0 : index
    %c0_16 = arith.constant 0 : index
    %17 = vector.load %arg7[%c0_15, %c0_16] : memref<1x128xf32, #tpu.memory_space<vmem>>, vector<1x128xf32>
    %18 = vector.broadcast %17 : vector<1x128xf32> to vector<8x128xf32>
    %19 = arith.addf %16, %18 : vector<8x128xf32>
    %c0_17 = arith.constant 0 : index
    %c0_18 = arith.constant 0 : index
    %20 = vector.load %arg8[%c0_17, %c0_18] : memref<8x128xf32, #tpu.memory_space<vmem>>, vector<8x128xf32>
    tpu.vector_store %arg8[%c0_17, %c0_18], %19 {strides = array<i32>} : memref<8x128xf32, #tpu.memory_space<vmem>>, vector<8x128xf32>,
    return
  }
  func.func @transform_0(%arg0: i32) -> (i32, i32) {
    %c0_i32 = arith.constant 0 : i32
    %c0_i32_0 = arith.constant 0 : i32
    return %arg0, %c0_i32 : i32, i32
  }
  func.func @transform_1(%arg0: i32) -> (i32, i32) {
    %c0_i32 = arith.constant 0 : i32
    %c0_i32_0 = arith.constant 0 : i32
    %c0_i32_1 = arith.constant 0 : i32
    return %c0_i32, %c0_i32_0 : i32, i32
  }
  func.func @transform_2(%arg0: i32) -> (i32, i32) {
    %c0_i32 = arith.constant 0 : i32
    %c0_i32_0 = arith.constant 0 : i32
    %c0_i32_1 = arith.constant 0 : i32
    return %c0_i32, %c0_i32_0 : i32, i32
  }
  func.func @transform_3(%arg0: i32) -> (i32, i32) {
    %c0_i32 = arith.constant 0 : i32
    %c0_i32_0 = arith.constant 0 : i32
    %c0_i32_1 = arith.constant 0 : i32
    return %c0_i32, %c0_i32_0 : i32, i32
  }
  func.func @transform_4(%arg0: i32) -> (i32, i32) {
    %c0_i32 = arith.constant 0 : i32
    %c0_i32_0 = arith.constant 0 : i32
    %c0_i32_1 = arith.constant 0 : i32
    return %c0_i32, %c0_i32_0 : i32, i32
  }
  func.func @transform_5(%arg0: i32) -> (i32, i32) {
    %c0_i32 = arith.constant 0 : i32
    %c0_i32_0 = arith.constant 0 : i32
    %c0_i32_1 = arith.constant 0 : i32
    return %c0_i32, %c0_i32_0 : i32, i32
  }
  func.func @transform_6(%arg0: i32) -> (i32, i32) {
    %c0_i32 = arith.constant 0 : i32
    %c0_i32_0 = arith.constant 0 : i32
    %c0_i32_1 = arith.constant 0 : i32
    return %c0_i32, %c0_i32_0 : i32, i32
  }
  func.func @transform_7(%arg0: i32) -> (i32, i32) {
    %c0_i32 = arith.constant 0 : i32
    %c0_i32_0 = arith.constant 0 : i32
    return %arg0, %c0_i32 : i32, i32
  }
}

</mosaic_0001>

<llo_original>
// kernel: dqn_forward.1
$region0: #{dqn_forward.1}
  #allocation0 [shape = 'u32[]', space=smem, size = 0x4, offset = 0x4, fixed_abs, tag = 'smem constant byte address 0x4 - core index']
  #allocation1 [shape = 'u32[144,128]{1,0:T(1,128)}', space=vmem, size = 0x12000, scoped, tag = 'internal scratch']
  %s0 = inlined_call_operand.vmem [shape: f32[8,16], index: 0, kind: input, shape index: {}]
  %s1 = inlined_call_operand.vmem [shape: f32[16,128], index: 1, kind: input, shape index: {}]
  %s2 = inlined_call_operand.vmem [shape: f32[1,128], index: 2, kind: input, shape index: {}]
  %s3 = inlined_call_operand.hbm [shape: f32[128,128], index: 3, kind: input, shape index: {}]
  %s4 = inlined_call_operand.vmem [shape: f32[1,128], index: 4, kind: input, shape index: {}]
  %s5 = inlined_call_operand.hbm [shape: f32[128,128], index: 5, kind: input, shape index: {}]
  %s6 = inlined_call_operand.hbm [shape: f32[1,128], index: 6, kind: input, shape index: {}]
  %s7 = inlined_call_operand.vmem [shape: f32[8,128], index: 7, kind: output, shape index: {}]
  %s8 = sld [smem:[#allocation0]]
  $region50: #{dqn_forward.1} parent=0
    _
  %s10 = ssub.s32 1, %s8
  %s11 = scalar_select 0, %s10, %s8
  $region1: #{dqn_forward.1} parent=0
    #allocation2 [shape = 'u8[65536]{0}', space=vmem, size = 0x10000, scoped, tag = 'input window, operand 3, single buffered']
    #allocation3 [shape = 's32[1]{0}', space=sflag, size = 0x4, scoped, tag = 'scoped memory for dqn_forward.1']
    #allocation4 [shape = 'u8[65536]{0}', space=vmem, size = 0x10000, scoped, tag = 'input window, operand 5, single buffered']
    #allocation5 [shape = 's32[1]{0}', space=sflag, size = 0x4, scoped, tag = 'scoped memory for dqn_forward.1']
    #allocation6 [shape = 'u8[512]{0}', space=vmem, size = 0x400, scoped, tag = 'input window, operand 6, single buffered']
    %12 = vsyncpa [#allocation3], 0
    %13 = vsyncpa [#allocation5], 0
    // Predicated region
    $region2: #{dqn_forward.1} parent=1 // pred_check
      _
    $region3: #{dqn_forward.1} parent=1 // pred_check_branch
      %15 = sbr.rel (0) target = $region5
    $region4: #{dqn_forward.1} parent=1 // pred_region
      _
    $region5: #{dqn_forward.1} parent=1 // pred_fallthru
      _
    // Predicated region
    $region6: #{dqn_forward.1} parent=1 // pred_check
      _
    $region7: #{dqn_forward.1} parent=1 // pred_check_branch
      %17 = sbr.rel (0) target = $region9
    $region8: #{dqn_forward.1} parent=1 // pred_region
      _
    $region9: #{dqn_forward.1} parent=1 // pred_fallthru
      _
    // Predicated region
    $region10: #{dqn_forward.1} parent=1 // pred_check
      _
    $region11: #{dqn_forward.1} parent=1 // pred_check_branch
      %19 = sbr.rel (0) target = $region13
    $region12: #{dqn_forward.1} parent=1 // pred_region
      _
    $region13: #{dqn_forward.1} parent=1 // pred_fallthru
      _
    // Predicated region
    $region14: #{dqn_forward.1} parent=1 // pred_check
      _
    $region15: #{dqn_forward.1} parent=1 // pred_check_branch
      %21 = sbr.rel (0) target = $region17
    $region16: #{dqn_forward.1} parent=1 // pred_region
      %s23 = ssub.s32 2048, 2048
      %24 = vsyncadd [#allocation3], %s23
      %s25 = sshll.u32 [#allocation2], 4
      %s26 = int_to_ptr.vmem [resolvable:$true] %s25
      %31 = dma.hbm_to_vmem [thread:$0]  %s3, 2048, %s26, [#allocation3], 128, 128, 8
    $region17: #{dqn_forward.1} parent=1 // pred_fallthru
      _
    // Predicated region
    $region18: #{dqn_forward.1} parent=1 // pred_check
      _
    $region19: #{dqn_forward.1} parent=1 // pred_check_branch
      %33 = sbr.rel (0) target = $region21
    $region20: #{dqn_forward.1} parent=1 // pred_region
      _
    $region21: #{dqn_forward.1} parent=1 // pred_fallthru
      _
    // Predicated region
    $region22: #{dqn_forward.1} parent=1 // pred_check
      _
    $region23: #{dqn_forward.1} parent=1 // pred_check_branch
      %35 = sbr.rel (0) target = $region25
    $region24: #{dqn_forward.1} parent=1 // pred_region
      %s37 = ssub.s32 2048, 2048
      %38 = vsyncadd [#allocation5], %s37
      %s39 = sshll.u32 [#allocation4], 4
      %s40 = int_to_ptr.vmem [resolvable:$true] %s39
      %45 = dma.hbm_to_vmem [thread:$0]  %s5, 2048, %s40, [#allocation5], 128, 128, 8
    $region25: #{dqn_forward.1} parent=1 // pred_fallthru
      _
    // Predicated region
    $region26: #{dqn_forward.1} parent=1 // pred_check
      _
    $region27: #{dqn_forward.1} parent=1 // pred_check_branch
      %47 = sbr.rel (0) target = $region29
    $region28: #{dqn_forward.1} parent=1 // pred_region
      %s49 = ssub.s32 16, 16
      %50 = vsyncadd [#allocation5], %s49
      %s52 = sshll.u32 [#allocation6], 4
      %s53 = int_to_ptr.vmem [resolvable:$true] %s52
      %55 = dma.hbm_to_vmem [thread:$0]  %s6, 16, %s53, [#allocation5]
    $region29: #{dqn_forward.1} parent=1 // pred_fallthru
      _
    // Predicated region
    $region30: #{dqn_forward.1} parent=1 // pred_check
      _
    $region31: #{dqn_forward.1} parent=1 // pred_check_branch
      %57 = sbr.rel (0) target = $region33
    $region32: #{dqn_forward.1} parent=1 // pred_region
      %58 = dma.done [#allocation3], 2048
    $region33: #{dqn_forward.1} parent=1 // pred_fallthru
      _
    // Predicated region
    $region34: #{dqn_forward.1} parent=1 // pred_check
      _
    $region35: #{dqn_forward.1} parent=1 // pred_check_branch
      %60 = sbr.rel (0) target = $region37
    $region36: #{dqn_forward.1} parent=1 // pred_region
      %61 = dma.done [#allocation5], 2048
    $region37: #{dqn_forward.1} parent=1 // pred_fallthru
      _
    // Predicated region
    $region38: #{dqn_forward.1} parent=1 // pred_check
      _
    $region39: #{dqn_forward.1} parent=1 // pred_check_branch
      %63 = sbr.rel (0) target = $region41
    $region40: #{dqn_forward.1} parent=1 // pred_region
      %64 = dma.done [#allocation5], 16
    $region41: #{dqn_forward.1} parent=1 // pred_fallthru
      _
    %v65 = vld [vmem:[%s0] sm:$0xff]
    %v66 = vld [vmem:[%s1] sm:$0xff]
    %v67 = vld [vmem:[%s1 + $0x8] sm:$0xff]
    %v68 = vld [vmem:[%s2] sm:$0x1]
    %v70 = vlaneseq
    %v71 = vshrl.u32 %v70, 7
    %v72 = vsub.s32 0, %v71
    %v73 = vrot.slane %v68, %v72
    %vm75 = vcmask 130048
    %v77 = vsel %vm75, %v65, 0
    %79 = vmatprep.subr.mxu0 0.0
    %80 = vmatpush1.msra.mxu0 0.0
    %81 = vmatprep.subr.mxu0 0.0
    %82 = vmatpush1.msra.mxu0 0.0
    %83 = vmatprep.subr.mxu0 0.0
    %84 = vmatpush1.msra.mxu0 0.0
    %85 = vmatprep.subr.mxu0 0.0
    %86 = vmatpush1.msra.mxu0 0.0
    %87 = vmatprep.subr.mxu0 0.0
    %88 = vmatpush1.msra.mxu0 0.0
    %89 = vmatprep.subr.mxu0 0.0
    %90 = vmatpush1.msra.mxu0 0.0
    %91 = vmatprep.subr.mxu0 0.0
    %92 = vmatpush1.msra.mxu0 0.0
    %93 = vmatprep.subr.mxu0 0.0
    %94 = vmatpush1.msra.mxu0 0.0
    %95 = vmatprep.subr.mxu0 0.0
    %96 = vmatpush1.msra.mxu0 0.0
    %97 = vmatprep.subr.mxu0 0.0
    %98 = vmatpush1.msra.mxu0 0.0
    %99 = vmatprep.subr.mxu0 0.0
    %100 = vmatpush1.msra.mxu0 0.0
    %101 = vmatprep.subr.mxu0 0.0
    %102 = vmatpush1.msra.mxu0 0.0
    %103 = vmatprep.subr.mxu0 0.0
    %104 = vmatpush1.msra.mxu0 0.0
    %105 = vmatprep.subr.mxu0 0.0
    %106 = vmatpush1.msra.mxu0 0.0
    %107 = vmatprep.subr.mxu0 0.0
    %108 = vmatpush1.msra.mxu0 %v67
    %109 = vmatprep.subr.mxu0 0.0
    %110 = vmatpush1.msra.mxu0 %v66
    %111 = vmatprep.subr.mxu0 0.0
    %112 = vmatpush2.msra.mxu0 0.0
    %113 = vmatprep.subr.mxu0 0.0
    %114 = vmatpush2.msra.mxu0 0.0
    %115 = vmatprep.subr.mxu0 0.0
    %116 = vmatpush2.msra.mxu0 0.0
    %117 = vmatprep.subr.mxu0 0.0
    %118 = vmatpush2.msra.mxu0 0.0
    %119 = vmatprep.subr.mxu0 0.0
    %120 = vmatpush2.msra.mxu0 0.0
    %121 = vmatprep.subr.mxu0 0.0
    %122 = vmatpush2.msra.mxu0 0.0
    %123 = vmatprep.subr.mxu0 0.0
    %124 = vmatpush2.msra.mxu0 0.0
    %125 = vmatprep.subr.mxu0 0.0
    %126 = vmatpush2.msra.mxu0 0.0
    %127 = vmatprep.subr.mxu0 0.0
    %128 = vmatpush2.msra.mxu0 0.0
    %129 = vmatprep.subr.mxu0 0.0
    %130 = vmatpush2.msra.mxu0 0.0
    %131 = vmatprep.subr.mxu0 0.0
    %132 = vmatpush2.msra.mxu0 0.0
    %133 = vmatprep.subr.mxu0 0.0
    %134 = vmatpush2.msra.mxu0 0.0
    %135 = vmatprep.subr.mxu0 0.0
    %136 = vmatpush2.msra.mxu0 0.0
    %137 = vmatprep.subr.mxu0 0.0
    %138 = vmatpush2.msra.mxu0 0.0
    %139 = vmatprep.subr.mxu0 0.0
    %140 = vmatpush2.msra.mxu0 0.0
    %141 = vmatprep.subr.mxu0 0.0
    %142 = vmatpush2.msra.mxu0 0.0
    %143 = vmatprep.mubr.f32.mxu0 0.0
    %144 = vmatmul.mubr.f32.gmra.mxu0 %v77
    %v145 = vpop.f32.mrf.mxu0
    %v146 = vadd.f32 %v73, %v145
    %v147 = vpop.f32.mrf.mxu0
    %148 = vdwg.mxu0
    %v149 = vmax.f32 %v146, 0.0
    %v150 = vld [vmem:[#allocation2] sm:$0xff]
    %v151 = vld [vmem:[#allocation2 + $0x8] sm:$0xff]
    %v152 = vld [vmem:[#allocation2 + $0x10] sm:$0xff]
    %v153 = vld [vmem:[#allocation2 + $0x18] sm:$0xff]
    %v154 = vld [vmem:[#allocation2 + $0x20] sm:$0xff]
    %v155 = vld [vmem:[#allocation2 + $0x28] sm:$0xff]
    %v156 = vld [vmem:[#allocation2 + $0x30] sm:$0xff]
    %v157 = vld [vmem:[#allocation2 + $0x38] sm:$0xff]
    %v158 = vld [vmem:[#allocation2 + $0x40] sm:$0xff]
    %v159 = vld [vmem:[#allocation2 + $0x48] sm:$0xff]
    %v160 = vld [vmem:[#allocation2 + $0x50] sm:$0xff]
    %v161 = vld [vmem:[#allocation2 + $0x58] sm:$0xff]
    %v162 = vld [vmem:[#allocation2 + $0x60] sm:$0xff]
    %v163 = vld [vmem:[#allocation2 + $0x68] sm:$0xff]
    %v164 = vld [vmem:[#allocation2 + $0x70] sm:$0xff]
    %v165 = vld [vmem:[#allocation2 + $0x78] sm:$0xff]
    %v166 = vld [vmem:[%s4] sm:$0x1]
    %v168 = vlaneseq
    %v169 = vshrl.u32 %v168, 7
    %v170 = vsub.s32 0, %v169
    %v171 = vrot.slane %v166, %v170
    %173 = vmatprep.subr.mxu0 0.0
    %174 = vmatpush1.msra.mxu0 %v165
    %175 = vmatprep.subr.mxu0 0.0
    %176 = vmatpush1.msra.mxu0 %v164
    %177 = vmatprep.subr.mxu0 0.0
    %178 = vmatpush1.msra.mxu0 %v163
    %179 = vmatprep.subr.mxu0 0.0
    %180 = vmatpush1.msra.mxu0 %v162
    %181 = vmatprep.subr.mxu0 0.0
    %182 = vmatpush1.msra.mxu0 %v161
    %183 = vmatprep.subr.mxu0 0.0
    %184 = vmatpush1.msra.mxu0 %v160
    %185 = vmatprep.subr.mxu0 0.0
    %186 = vmatpush1.msra.mxu0 %v159
    %187 = vmatprep.subr.mxu0 0.0
    %188 = vmatpush1.msra.mxu0 %v158
    %189 = vmatprep.subr.mxu0 0.0
    %190 = vmatpush1.msra.mxu0 %v157
    %191 = vmatprep.subr.mxu0 0.0
    %192 = vmatpush1.msra.mxu0 %v156
    %193 = vmatprep.subr.mxu0 0.0
    %194 = vmatpush1.msra.mxu0 %v155
    %195 = vmatprep.subr.mxu0 0.0
    %196 = vmatpush1.msra.mxu0 %v154
    %197 = vmatprep.subr.mxu0 0.0
    %198 = vmatpush1.msra.mxu0 %v153
    %199 = vmatprep.subr.mxu0 0.0
    %200 = vmatpush1.msra.mxu0 %v152
    %201 = vmatprep.subr.mxu0 0.0
    %202 = vmatpush1.msra.mxu0 %v151
    %203 = vmatprep.subr.mxu0 0.0
    %204 = vmatpush1.msra.mxu0 %v150
    %205 = vmatprep.subr.mxu0 0.0
    %206 = vmatpush2.msra.mxu0 0.0
    %207 = vmatprep.subr.mxu0 0.0
    %208 = vmatpush2.msra.mxu0 0.0
    %209 = vmatprep.subr.mxu0 0.0
    %210 = vmatpush2.msra.mxu0 0.0
    %211 = vmatprep.subr.mxu0 0.0
    %212 = vmatpush2.msra.mxu0 0.0
    %213 = vmatprep.subr.mxu0 0.0
    %214 = vmatpush2.msra.mxu0 0.0
    %215 = vmatprep.subr.mxu0 0.0
    %216 = vmatpush2.msra.mxu0 0.0
    %217 = vmatprep.subr.mxu0 0.0
    %218 = vmatpush2.msra.mxu0 0.0
    %219 = vmatprep.subr.mxu0 0.0
    %220 = vmatpush2.msra.mxu0 0.0
    %221 = vmatprep.subr.mxu0 0.0
    %222 = vmatpush2.msra.mxu0 0.0
    %223 = vmatprep.subr.mxu0 0.0
    %224 = vmatpush2.msra.mxu0 0.0
    %225 = vmatprep.subr.mxu0 0.0
    %226 = vmatpush2.msra.mxu0 0.0
    %227 = vmatprep.subr.mxu0 0.0
    %228 = vmatpush2.msra.mxu0 0.0
    %229 = vmatprep.subr.mxu0 0.0
    %230 = vmatpush2.msra.mxu0 0.0
    %231 = vmatprep.subr.mxu0 0.0
    %232 = vmatpush2.msra.mxu0 0.0
    %233 = vmatprep.subr.mxu0 0.0
    %234 = vmatpush2.msra.mxu0 0.0
    %235 = vmatprep.subr.mxu0 0.0
    %236 = vmatpush2.msra.mxu0 0.0
    %237 = vmatprep.mubr.f32.mxu0 0.0
    %238 = vmatmul.mubr.f32.gmra.mxu0 %v149
    %v239 = vpop.f32.mrf.mxu0
    %v240 = vadd.f32 %v171, %v239
    %v241 = vpop.f32.mrf.mxu0
    %242 = vdwg.mxu0
    %v243 = vmax.f32 %v240, 0.0
    %v244 = vld [vmem:[#allocation4] sm:$0xff]
    %v245 = vld [vmem:[#allocation4 + $0x8] sm:$0xff]
    %v246 = vld [vmem:[#allocation4 + $0x10] sm:$0xff]
    %v247 = vld [vmem:[#allocation4 + $0x18] sm:$0xff]
    %v248 = vld [vmem:[#allocation4 + $0x20] sm:$0xff]
    %v249 = vld [vmem:[#allocation4 + $0x28] sm:$0xff]
    %v250 = vld [vmem:[#allocation4 + $0x30] sm:$0xff]
    %v251 = vld [vmem:[#allocation4 + $0x38] sm:$0xff]
    %v252 = vld [vmem:[#allocation4 + $0x40] sm:$0xff]
    %v253 = vld [vmem:[#allocation4 + $0x48] sm:$0xff]
    %v254 = vld [vmem:[#allocation4 + $0x50] sm:$0xff]
    %v255 = vld [vmem:[#allocation4 + $0x58] sm:$0xff]
    %v256 = vld [vmem:[#allocation4 + $0x60] sm:$0xff]
    %v257 = vld [vmem:[#allocation4 + $0x68] sm:$0xff]
    %v258 = vld [vmem:[#allocation4 + $0x70] sm:$0xff]
    %v259 = vld [vmem:[#allocation4 + $0x78] sm:$0xff]
    %v260 = vld [vmem:[#allocation6] sm:$0x1]
    %v262 = vlaneseq
    %v263 = vshrl.u32 %v262, 7
    %v264 = vsub.s32 0, %v263
    %v265 = vrot.slane %v260, %v264
    %267 = vmatprep.subr.mxu0 0.0
    %268 = vmatpush1.msra.mxu0 %v259
    %269 = vmatprep.subr.mxu0 0.0
    %270 = vmatpush1.msra.mxu0 %v258
    %271 = vmatprep.subr.mxu0 0.0
    %272 = vmatpush1.msra.mxu0 %v257
    %273 = vmatprep.subr.mxu0 0.0
    %274 = vmatpush1.msra.mxu0 %v256
    %275 = vmatprep.subr.mxu0 0.0
    %276 = vmatpush1.msra.mxu0 %v255
    %277 = vmatprep.subr.mxu0 0.0
    %278 = vmatpush1.msra.mxu0 %v254
    %279 = vmatprep.subr.mxu0 0.0
    %280 = vmatpush1.msra.mxu0 %v253
    %281 = vmatprep.subr.mxu0 0.0
    %282 = vmatpush1.msra.mxu0 %v252
    %283 = vmatprep.subr.mxu0 0.0
    %284 = vmatpush1.msra.mxu0 %v251
    %285 = vmatprep.subr.mxu0 0.0
    %286 = vmatpush1.msra.mxu0 %v250
    %287 = vmatprep.subr.mxu0 0.0
    %288 = vmatpush1.msra.mxu0 %v249
    %289 = vmatprep.subr.mxu0 0.0
    %290 = vmatpush1.msra.mxu0 %v248
    %291 = vmatprep.subr.mxu0 0.0
    %292 = vmatpush1.msra.mxu0 %v247
    %293 = vmatprep.subr.mxu0 0.0
    %294 = vmatpush1.msra.mxu0 %v246
    %295 = vmatprep.subr.mxu0 0.0
    %296 = vmatpush1.msra.mxu0 %v245
    %297 = vmatprep.subr.mxu0 0.0
    %298 = vmatpush1.msra.mxu0 %v244
    %299 = vmatprep.subr.mxu0 0.0
    %300 = vmatpush2.msra.mxu0 0.0
    %301 = vmatprep.subr.mxu0 0.0
    %302 = vmatpush2.msra.mxu0 0.0
    %303 = vmatprep.subr.mxu0 0.0
    %304 = vmatpush2.msra.mxu0 0.0
    %305 = vmatprep.subr.mxu0 0.0
    %306 = vmatpush2.msra.mxu0 0.0
    %307 = vmatprep.subr.mxu0 0.0
    %308 = vmatpush2.msra.mxu0 0.0
    %309 = vmatprep.subr.mxu0 0.0
    %310 = vmatpush2.msra.mxu0 0.0
    %311 = vmatprep.subr.mxu0 0.0
    %312 = vmatpush2.msra.mxu0 0.0
    %313 = vmatprep.subr.mxu0 0.0
    %314 = vmatpush2.msra.mxu0 0.0
    %315 = vmatprep.subr.mxu0 0.0
    %316 = vmatpush2.msra.mxu0 0.0
    %317 = vmatprep.subr.mxu0 0.0
    %318 = vmatpush2.msra.mxu0 0.0
    %319 = vmatprep.subr.mxu0 0.0
    %320 = vmatpush2.msra.mxu0 0.0
    %321 = vmatprep.subr.mxu0 0.0
    %322 = vmatpush2.msra.mxu0 0.0
    %323 = vmatprep.subr.mxu0 0.0
    %324 = vmatpush2.msra.mxu0 0.0
    %325 = vmatprep.subr.mxu0 0.0
    %326 = vmatpush2.msra.mxu0 0.0
    %327 = vmatprep.subr.mxu0 0.0
    %328 = vmatpush2.msra.mxu0 0.0
    %329 = vmatprep.subr.mxu0 0.0
    %330 = vmatpush2.msra.mxu0 0.0
    %331 = vmatprep.mubr.f32.mxu0 0.0
    %332 = vmatmul.mubr.f32.gmra.mxu0 %v243
    %v333 = vpop.f32.mrf.mxu0
    %v334 = vadd.f32 %v265, %v333
    %v335 = vpop.f32.mrf.mxu0
    %336 = vdwg.mxu0
    %337 = vst [vmem:[%s7] sm:$0xff] %v334
    // Predicated region
    $region42: #{dqn_forward.1} parent=1 // pred_check
      _
    $region43: #{dqn_forward.1} parent=1 // pred_check_branch
      %339 = sbr.rel (0) target = $region45
    $region44: #{dqn_forward.1} parent=1 // pred_region
      _
    $region45: #{dqn_forward.1} parent=1 // pred_fallthru
      _
    // Predicated region
    $region46: #{dqn_forward.1} parent=1 // pred_check
      _
    $region47: #{dqn_forward.1} parent=1 // pred_check_branch
      %341 = sbr.rel (0) target = $region49
    $region48: #{dqn_forward.1} parent=1 // pred_region
      _
    $region49: #{dqn_forward.1} parent=1 // pred_fallthru
      _
    %342 = vsyncpa [#allocation3], 1
    %343 = vsyncpa [#allocation5], 1

</llo_original>
